<compile_context>
chip_gen: v5e
topology: v5e:2x2
jax: 0.10.0
libtpu: 0.0.40
codegen_flags: <defaults>
</compile_context>

<pallas_src>
import jax
import jax.numpy as jnp
from jax import lax
from jax.experimental import pallas as pl
from jax.experimental.pallas import tpu as pltpu


def _patch_embed_kernel(x_ref, w_ref, b_ref, o_ref):
    # x_ref: (tm, K)      bf16 patch tile
    # w_ref: (K, n_pad)   bf16 projection weight (same block every step -> resident)
    # b_ref: (1, n_pad)   f32 bias
    # o_ref: (tm, n_pad)  output tile (lane-dense, n_pad % 128 == 0)
    acc = jnp.dot(x_ref[...], w_ref[...], preferred_element_type=jnp.float32)
    acc = acc + b_ref[...]
    o_ref[...] = acc.astype(o_ref.dtype)


def _choose_row_tile(M, K, n_pad, bytes_in, bytes_out, vmem_budget, weight_bytes):
    """Row tile (multiple of 8) that fits double-buffered in VMEM, keeps >= 2
    grid steps when possible, and the padded row count it implies."""
    # Double-buffered input + output tile per row, weight/bias stay resident.
    denom = 2 * (K * bytes_in + n_pad * bytes_out)
    max_rows = max(8, (vmem_budget - weight_bytes) // denom)
    max_rows = (max_rows // 8) * 8
    # Cap: ~1024-row tiles already sit at the HBM-roofline knee; bigger only
    # burns VMEM headroom.
    tm = min(max_rows, 1024)
    if M > 8:
        # Keep at least two grid steps so the "parallel" axis can use megacore.
        half = ((M + 1) // 2 + 7) // 8 * 8
        tm = min(tm, half)
    tm = max(8, tm)
    m_pad = ((M + tm - 1) // tm) * tm
    return tm, m_pad


def patch_embed_forward(x, weight, bias, patch_size, compute_dtype=jnp.bfloat16):
    """x: (B, C, H, W) NCHW.  weight: (embed_dim, C, p, p) OIHW.  bias: (embed_dim,).

    Returns (B, num_patches, embed_dim) in x.dtype, matching
    `conv(x).flatten(2).transpose(1, 2)` of the PyTorch module (norm_layer=None).
    """
    B, C, H, W = x.shape
    p = patch_size
    assert H % p == 0 and W % p == 0, (H, W, p)
    E = weight.shape[0]
    hp, wp = H // p, W // p
    num_patches = hp * wp
    M = B * num_patches
    K = C * p * p
    n_pad = ((E + 127) // 128) * 128  # lane-dense output width
    out_dtype = x.dtype

    # im2col: (B, C, H, W) -> (M, K) with columns in (c, kh, kw) order
    # (matches OIHW weight flatten).  Cast to the narrow compute dtype first
    # so this extra HBM pass is half-width.
    xc = x.astype(compute_dtype)
    patches = (xc.reshape(B, C, hp, p, wp, p)
                 .transpose(0, 2, 4, 1, 3, 5)
                 .reshape(M, K))

    # Weight (E, C, p, p) -> (K, E), zero-padded to (K, n_pad); bias -> (1, n_pad) f32.
    w2d = weight.reshape(E, K).T.astype(compute_dtype)
    b1d = bias.astype(jnp.float32)
    if n_pad != E:
        w2d = jnp.pad(w2d, ((0, 0), (0, n_pad - E)))
        b1d = jnp.pad(b1d, (0, n_pad - E))
    b2d = b1d.reshape(1, n_pad)

    bytes_in = jnp.dtype(compute_dtype).itemsize
    bytes_out = jnp.dtype(out_dtype).itemsize
    weight_bytes = K * n_pad * bytes_in + n_pad * 4
    vmem_budget = 32 * 1024 * 1024  # conservative: fits v7x's 64 MiB physical VMEM
    tm, m_pad = _choose_row_tile(M, K, n_pad, bytes_in, bytes_out,
                                 vmem_budget, weight_bytes)
    if m_pad != M:
        patches = jnp.pad(patches, ((0, m_pad - M), (0, 0)))

    need_bytes = weight_bytes + 2 * tm * (K * bytes_in + n_pad * bytes_out)
    vmem_limit = int(min(96 * 2**20, max(32 * 2**20, need_bytes + 8 * 2**20)))

    cost = pl.CostEstimate(
        flops=2 * m_pad * K * n_pad,
        transcendentals=0,
        bytes_accessed=(m_pad * K * bytes_in + K * n_pad * bytes_in
                        + m_pad * n_pad * bytes_out + n_pad * 4),
    )

    out = pl.pallas_call(
        _patch_embed_kernel,
        out_shape=jax.ShapeDtypeStruct((m_pad, n_pad), out_dtype),
        grid_spec=pltpu.PrefetchScalarGridSpec(
            num_scalar_prefetch=0,
            grid=(m_pad // tm,),
            in_specs=[
                pl.BlockSpec((tm, K), lambda i: (i, 0)),
                pl.BlockSpec((K, n_pad), lambda i: (0, 0)),
                pl.BlockSpec((1, n_pad), lambda i: (0, 0)),
            ],
            out_specs=pl.BlockSpec((tm, n_pad), lambda i: (i, 0)),
        ),
        compiler_params=pltpu.CompilerParams(
            dimension_semantics=("parallel",),
            vmem_limit_bytes=vmem_limit,
        ),
        cost_estimate=cost,
    )(patches, w2d, b2d)

    return out[:M, :E].reshape(B, num_patches, E)


def _reference(x, weight, bias, patch_size):
    # Reference via lax conv (NCHW / OIHW) in f32, then flatten(2).transpose(1,2).
    y = lax.conv_general_dilated(
        x, weight,
        window_strides=(patch_size, patch_size),
        padding="VALID",
        dimension_numbers=("NCHW", "OIHW", "NCHW"),
    )
    y = y + bias.reshape(1, -1, 1, 1)
    B, E, Hp, Wp = y.shape
    return y.reshape(B, E, Hp * Wp).transpose(0, 2, 1)


if __name__ == "__main__":
    # Small shapes consistent with the module's forward:
    # img_size=16, patch_size=4, in_chans=4, embed_dim=32, batch=2.
    B, C, IMG, P, E = 2, 4, 16, 4, 32

    key = jax.random.PRNGKey(0)
    kx, kw, kb = jax.random.split(key, 3)
    x = jax.random.normal(kx, (B, C, IMG, IMG), dtype=jnp.float32)
    weight = jax.random.normal(kw, (E, C, P, P), dtype=jnp.float32) * 0.05
    bias = jax.random.normal(kb, (E,), dtype=jnp.float32) * 0.05

    fwd = jax.jit(patch_embed_forward, static_argnames=("patch_size", "compute_dtype"))
    out = fwd(x, weight, bias, patch_size=P)
    out = jax.block_until_ready(out)

    ref = _reference(x, weight, bias, P)
    assert out.shape == (B, (IMG // P) ** 2, E), out.shape
    # bf16 matmul operands (f32 accumulate) -> loosened tolerance vs f32 reference.
    assert jnp.allclose(out, ref, atol=3e-2, rtol=3e-2), float(
        jnp.max(jnp.abs(out - ref))
    )

    print("KERNEL_OK")
</pallas_src>

<mosaic_0001>
module attributes {stable_mosaic.version = 11 : i64} {
  func.func @_patch_embed_kernel(%arg0: i32, %arg1: memref<16x64xbf16, #tpu.memory_space<vmem>>, %arg2: memref<64x128xbf16, #tpu.memory_space<vmem>>, %arg3: memref<1x128xf32, #tpu.memory_space<vmem>>, %arg4: memref<16x128xf32, #tpu.memory_space<vmem>>) attributes {dimension_semantics = [#tpu.dimension_semantics<parallel>], iteration_bounds = array<i64: 2>, scalar_prefetch = 0 : i64, scratch_operands = 0 : i64, tpu.core_type = #tpu.core_type<tc>, window_params = [{transform_indices = @transform_0, window_bounds = array<i64: 16, 64>}, {pipeline_mode = #tpu.pipeline_mode<synchronous>, transform_indices = @transform_1, window_bounds = array<i64: 64, 128>}, {pipeline_mode = #tpu.pipeline_mode<synchronous>, transform_indices = @transform_2, window_bounds = array<i64: 1, 128>}, {transform_indices = @transform_3, window_bounds = array<i64: 16, 128>}]} {
    %c0 = arith.constant 0 : index
    %c0_0 = arith.constant 0 : index
    %0 = vector.load %arg1[%c0, %c0_0] : memref<16x64xbf16, #tpu.memory_space<vmem>>, vector<16x64xbf16>
    %c0_1 = arith.constant 0 : index
    %c0_2 = arith.constant 0 : index
    %1 = vector.load %arg2[%c0_1, %c0_2] : memref<64x128xbf16, #tpu.memory_space<vmem>>, vector<64x128xbf16>
    %cst = arith.constant dense<0.000000e+00> : vector<16x128xf32>
    %2 = tpu.matmul %0, %1, %cst {dimension_numbers = #tpu.dot_dimension_numbers<[1], [0], [0], [1], [0, 0, 1, 1], [], []>} : vector<16x64xbf16>, vector<64x128xbf16>, vector<16x128xf32> -> vector<16x128xf32>
    %c0_3 = arith.constant 0 : index
    %c0_4 = arith.constant 0 : index
    %3 = vector.load %arg3[%c0_3, %c0_4] : memref<1x128xf32, #tpu.memory_space<vmem>>, vector<1x128xf32>
    %4 = vector.broadcast %3 : vector<1x128xf32> to vector<16x128xf32>
    %5 = arith.addf %2, %4 : vector<16x128xf32>
    %c0_5 = arith.constant 0 : index
    %c0_6 = arith.constant 0 : index
    %6 = vector.load %arg4[%c0_5, %c0_6] : memref<16x128xf32, #tpu.memory_space<vmem>>, vector<16x128xf32>
    tpu.vector_store %arg4[%c0_5, %c0_6], %5 {strides = array<i32>} : memref<16x128xf32, #tpu.memory_space<vmem>>, vector<16x128xf32>,
    return
  }
  func.func @transform_0(%arg0: i32) -> (i32, i32) {
    %c0_i32 = arith.constant 0 : i32
    %c0_i32_0 = arith.constant 0 : i32
    return %arg0, %c0_i32 : i32, i32
  }
  func.func @transform_1(%arg0: i32) -> (i32, i32) {
    %c0_i32 = arith.constant 0 : i32
    %c0_i32_0 = arith.constant 0 : i32
    %c0_i32_1 = arith.constant 0 : i32
    return %c0_i32, %c0_i32_0 : i32, i32
  }
  func.func @transform_2(%arg0: i32) -> (i32, i32) {
    %c0_i32 = arith.constant 0 : i32
    %c0_i32_0 = arith.constant 0 : i32
    %c0_i32_1 = arith.constant 0 : i32
    return %c0_i32, %c0_i32_0 : i32, i32
  }
  func.func @transform_3(%arg0: i32) -> (i32, i32) {
    %c0_i32 = arith.constant 0 : i32
    %c0_i32_0 = arith.constant 0 : i32
    return %arg0, %c0_i32 : i32, i32
  }
}

</mosaic_0001>

<llo_original>
// kernel: patch_embed_forward.1
$region0: #{patch_embed_forward.1}
  #allocation0 [shape = 'u32[]', space=smem, size = 0x4, offset = 0x4, fixed_abs, tag = 'smem constant byte address 0x4 - core index']
  #allocation1 [shape = 'u32[72,128]{1,0:T(1,128)}', space=vmem, size = 0x9000, scoped, tag = 'internal scratch']
  %s0 = inlined_call_operand.vmem [shape: bf16[32,64], index: 0, kind: input, shape index: {}]
  %s1 = inlined_call_operand.vmem [shape: bf16[64,128], index: 1, kind: input, shape index: {}]
  %s2 = inlined_call_operand.vmem [shape: f32[1,128], index: 2, kind: input, shape index: {}]
  %s3 = inlined_call_operand.hbm [shape: f32[32,128], index: 3, kind: output, shape index: {}]
  %s4 = sld [smem:[#allocation0]]
  $region45: #{patch_embed_forward.1} parent=0
    _
  %s6 = ssub.s32 1, %s4
  %s7 = scalar_select 0, %s6, %s4
  $region1: #{patch_embed_forward.1} parent=0
    #allocation2 [shape = 'u8[16384]{0}', space=vmem, size = 0x4000, scoped, tag = 'output window, operand 0']
    #allocation3 [shape = 's32[2]{0}', space=sflag, size = 0x8, scoped, tag = 'scoped memory for patch_embed_forward.1']
    %8 = vsyncpa [#allocation3], 0
    %s9 = scalar_lea.sflag [#allocation3], 1
    %10 = vsyncpa %s9, 0
    loop: start=0, step=1, limit=4
    $region2: #{patch_embed_forward.1} parent=1 // loop_pre_header
      _
    $region3: #{patch_embed_forward.1} parent=1 // loop_header
      %s12 = sphi 0, %s16
      %p13 = scmp.ge.s32.totalorder %s12, 4
      %s22 = sphi 0, %s24
      %s25 = sphi 0, %s22
      %s26 = sphi 0, %s25
      %s42 = sphi 0, %s26
      %s46 = sphi 0, %s46
      %s48 = sphi 0, %s46
      %s49 = sphi 0, %s48
      %s63 = sphi 0, %s49
      %s67 = sphi 0, %s67
      %s69 = sphi 0, %s67
      %s70 = sphi 0, %s69
      %s84 = sphi 0, %s70
      %s90 = sphi 0, %s92
      %s93 = sphi 0, %s90
      %s94 = sphi 0, %s93
      %s110 = sphi 0, %s94
    $region4: #{patch_embed_forward.1} parent=1 // loop_header_branch
      %15 = sbr.rel (%p13) target = $region8
    $region5: #{patch_embed_forward.1} parent=1 // loop_body
      %s17 = ssub.s32 %s12, 1
      %s18 = ssub.s32 %s12, 2
      %s19 = sadd.s32 %s12, 1
      %s20 = ssub.s32 %s12, %s19
      %p21 = scmp.eq.s32.totalorder %s20, 0
      %s23 = sadd.s32 %s22, 1
      %s24 = scalar_select %p21, %s22, %s23
      %p27 = pneg %p21
      %p28 = scmp.eq.s32.totalorder %s12, 1
      %p29 = por %p27, %p28
      %p30 = scmp.ne.s32.totalorder %s22, %s25
      %p31 = scmp.eq.s32.totalorder %s12, 0
      %p32 = por %p30, %p31
      %p33 = scmp.ne.s32.totalorder %s22, %s25
      %p34 = scmp.eq.s32.totalorder %s17, 1
      %p35 = por %p33, %p34
      %p36 = scmp.ne.s32.totalorder %s25, %s26
      %p37 = scmp.eq.s32.totalorder %s17, 0
      %p38 = por %p36, %p37
      %p39 = scmp.ne.s32.totalorder %s25, %s26
      %p40 = scmp.eq.s32.totalorder %s18, 1
      %p41 = por %p39, %p40
      %p43 = scmp.ne.s32.totalorder %s26, %s42
      %p44 = scmp.eq.s32.totalorder %s18, 0
      %p45 = por %p43, %p44
      %s47 = sadd.s32 %s46, 1
      %p50 = scmp.eq.s32.totalorder %s12, 1
      %p51 = scmp.ne.s32.totalorder %s46, %s48
      %p52 = scmp.eq.s32.totalorder %s12, 0
      %p53 = por %p51, %p52
      %p54 = scmp.ne.s32.totalorder %s46, %s48
      %p55 = scmp.eq.s32.totalorder %s17, 1
      %p56 = por %p54, %p55
      %p57 = scmp.ne.s32.totalorder %s48, %s49
      %p58 = scmp.eq.s32.totalorder %s17, 0
      %p59 = por %p57, %p58
      %p60 = scmp.ne.s32.totalorder %s48, %s49
      %p61 = scmp.eq.s32.totalorder %s18, 1
      %p62 = por %p60, %p61
      %p64 = scmp.ne.s32.totalorder %s49, %s63
      %p65 = scmp.eq.s32.totalorder %s18, 0
      %p66 = por %p64, %p65
      %s68 = sadd.s32 %s67, 1
      %p71 = scmp.eq.s32.totalorder %s12, 1
      %p72 = scmp.ne.s32.totalorder %s67, %s69
      %p73 = scmp.eq.s32.totalorder %s12, 0
      %p74 = por %p72, %p73
      %p75 = scmp.ne.s32.totalorder %s67, %s69
      %p76 = scmp.eq.s32.totalorder %s17, 1
      %p77 = por %p75, %p76
      %p78 = scmp.ne.s32.totalorder %s69, %s70
      %p79 = scmp.eq.s32.totalorder %s17, 0
      %p80 = por %p78, %p79
      %p81 = scmp.ne.s32.totalorder %s69, %s70
      %p82 = scmp.eq.s32.totalorder %s18, 1
      %p83 = por %p81, %p82
      %p85 = scmp.ne.s32.totalorder %s70, %s84
      %p86 = scmp.eq.s32.totalorder %s18, 0
      %p87 = por %p85, %p86
      %s88 = ssub.s32 %s12, %s19
      %p89 = scmp.eq.s32.totalorder %s88, 0
      %s91 = sadd.s32 %s90, 1
      %s92 = scalar_select %p89, %s90, %s91
      %p95 = pneg %p89
      %p96 = scmp.eq.s32.totalorder %s12, 1
      %p97 = por %p95, %p96
      %p98 = scmp.ne.s32.totalorder %s90, %s93
      %p99 = scmp.eq.s32.totalorder %s12, 0
      %p100 = por %p98, %p99
      %p101 = scmp.ne.s32.totalorder %s90, %s93
      %p102 = scmp.eq.s32.totalorder %s17, 1
      %p103 = por %p101, %p102
      %p104 = scmp.ne.s32.totalorder %s93, %s94
      %p105 = scmp.eq.s32.totalorder %s17, 0
      %p106 = por %p104, %p105
      %p107 = scmp.ne.s32.totalorder %s93, %s94
      %p108 = scmp.eq.s32.totalorder %s18, 1
      %p109 = por %p107, %p108
      %p111 = scmp.ne.s32.totalorder %s94, %s110
      %p112 = scmp.eq.s32.totalorder %s18, 0
      %p113 = por %p111, %p112
      %p114 = scmp.le.s32.totalorder 1, %s12
      %p115 = scmp.lt.s32.totalorder %s12, 3
      %p116 = pnand %p114, %p115
      %p117 = pneg %p116
      // Predicated region
      $region9: #{patch_embed_forward.1} parent=5 // pred_check
        _
      $region10: #{patch_embed_forward.1} parent=5 // pred_check_branch
        %119 = sbr.rel (%p116) target = $region12
      $region11: #{patch_embed_forward.1} parent=5 // pred_region
        %s120 = ssub.s32 %s12, 1
        // Predicated region
        $region13: #{patch_embed_forward.1} parent=11 // pred_check
          %p121 = pneg %p59
        $region14: #{patch_embed_forward.1} parent=11 // pred_check_branch
          %123 = sbr.rel (%p121) target = $region16
        $region15: #{patch_embed_forward.1} parent=11 // pred_region
          _
        $region16: #{patch_embed_forward.1} parent=11 // pred_fallthru
          _
        // Predicated region
        $region17: #{patch_embed_forward.1} parent=11 // pred_check
          %p124 = pneg %p80
        $region18: #{patch_embed_forward.1} parent=11 // pred_check_branch
          %126 = sbr.rel (%p124) target = $region20
        $region19: #{patch_embed_forward.1} parent=11 // pred_region
          _
        $region20: #{patch_embed_forward.1} parent=11 // pred_fallthru
          _
      $region12: #{patch_embed_forward.1} parent=5 // pred_fallthru
        _
      %p127 = scmp.lt.s32.totalorder %s12, 2
      // Predicated region
      $region21: #{patch_embed_forward.1} parent=5 // pred_check
        %p128 = pneg %p127
      $region22: #{patch_embed_forward.1} parent=5 // pred_check_branch
        %130 = sbr.rel (%p128) target = $region24
      $region23: #{patch_embed_forward.1} parent=5 // pred_region
        // Predicated region
        $region25: #{patch_embed_forward.1} parent=23 // pred_check
          %p131 = pneg %p32
        $region26: #{patch_embed_forward.1} parent=23 // pred_check_branch
          %133 = sbr.rel (%p131) target = $region28
        $region27: #{patch_embed_forward.1} parent=23 // pred_region
          %s134 = smul.u32 2, %s12
          %p135 = scmp.lt.s32.totalorder %s134, 3
          %s136 = scalar_select %p135, %s134, 3
          %s137 = smul.addr %s136, 4
          %s138 = scalar_lea.vmem %s0, %s137
          %s139 = smul.u32 2, %s12
        $region28: #{patch_embed_forward.1} parent=23 // pred_fallthru
          _
      $region24: #{patch_embed_forward.1} parent=5 // pred_fallthru
        _
      %p140 = scmp.le.s32.totalorder 1, %s12
      %p141 = scmp.lt.s32.totalorder %s12, 3
      %p142 = pnand %p140, %p141
      %p143 = pneg %p142
      // Predicated region
      $region29: #{patch_embed_forward.1} parent=5 // pred_check
        _
      $region30: #{patch_embed_forward.1} parent=5 // pred_check_branch
        %145 = sbr.rel (%p142) target = $region32
      $region31: #{patch_embed_forward.1} parent=5 // pred_region
        %s146 = ssub.s32 %s12, 1
        %s147 = smul.u32 2, %s17
        %p148 = scmp.lt.s32.totalorder %s147, 3
        %s149 = scalar_select %p148, %s147, 3
        %s150 = smul.addr %s149, 4
        %s151 = scalar_lea.vmem %s0, %s150
        %p152 = pneg %p38
        %p153 = pneg %p35
        %p154 = pneg %p59
        %p155 = pneg %p56
        %p156 = pneg %p80
        %p157 = pneg %p77
        %p158 = pneg %p106
        %p159 = pneg %p103
        %s160 = sand.u32 %s93, 1
        %s161 = scalar_lea.sflag [#allocation3], %s160
        %s162 = sand.u32 %s93, 1
        %s163 = smul.addr %s162, 16
        %s164 = scalar_lea.vmem [#allocation2], %s163
        %s165 = smul.u32 2, %s17
        %p166 = scmp.lt.s32.totalorder %s165, 3
        %s167 = scalar_select %p166, %s165, 3
        %s168 = smul.addr %s167, 4
        %s169 = scalar_lea.vmem %s0, %s168
        %s170 = smul.u32 2, %s17
        %s171 = smul.u32 2, %s17
        %v173 = vld [vmem:[%s169] sm:$0xf]
        %v174 = vld [vmem:[%s169 + $0x4] sm:$0xf]
        %v175 = vld [vmem:[%s1] sm:$0xf]
        %v176 = vld [vmem:[%s1 + $0x4] sm:$0xf]
        %v177 = vld [vmem:[%s1 + $0x8] sm:$0xf]
        %v178 = vld [vmem:[%s1 + $0xc] sm:$0xf]
        %v179 = vld [vmem:[%s1 + $0x10] sm:$0xf]
        %v180 = vld [vmem:[%s1 + $0x14] sm:$0xf]
        %v181 = vld [vmem:[%s1 + $0x18] sm:$0xf]
        %v182 = vld [vmem:[%s1 + $0x1c] sm:$0xf]
        %v183 = vld [vmem:[%s2] sm:$0x1]
        %v185 = vperm.slane %v183, 0
        %v189 = vunpack.c.l.b16 %v173
        %v190 = vunpack.c.l.b16 %v174
        %v191 = vpack.c.b16 %v190, %v189
        %v200 = vunpack.c.l.b16 %v175
        %v201 = vunpack.c.l.b16 %v176
        %v202 = vunpack.c.l.b16 %v177
        %v203 = vunpack.c.l.b16 %v178
        %v204 = vunpack.c.l.b16 %v179
        %v205 = vunpack.c.l.b16 %v180
        %v206 = vunpack.c.l.b16 %v181
        %v207 = vunpack.c.l.b16 %v182
        %v208 = vpack.c.b16 %v201, %v200
        %v209 = vpack.c.b16 %v203, %v202
        %v210 = vpack.c.b16 %v205, %v204
        %v211 = vpack.c.b16 %v207, %v206
        %vm216 = vcmask 523264
        %v218 = vsel %vm216, %v191, 0
        %220 = vmatpush.bf16.msra.mxu0 0
        %221 = vmatpush.bf16.msra.mxu0 0
        %222 = vmatpush.bf16.msra.mxu0 0
        %223 = vmatpush.bf16.msra.mxu0 0
        %224 = vmatpush.bf16.msra.mxu0 %v211
        %225 = vmatpush.bf16.msra.mxu0 %v210
        %226 = vmatpush.bf16.msra.mxu0 %v209
        %227 = vmatpush.bf16.msra.mxu0 %v208
        %228 = vmatmul.bf16.gmra.mxu0 %v218
        %v229 = vpop.f32.mrf.mxu0
        %v230 = vadd.f32 %v185, %v229
        %v231 = vpop.f32.mrf.mxu0
        %v232 = vadd.f32 %v185, %v231
        %233 = vdwg.mxu0
        %234 = vst [vmem:[%s164] sm:$0xff] %v230
        %235 = vst [vmem:[%s164 + $0x8] sm:$0xff] %v232
        %s236 = sand.u32 %s93, 1
        %s237 = scalar_lea.sflag [#allocation3], %s236
        %s238 = sand.u32 %s93, 1
        %s239 = smul.addr %s238, 16
        %s240 = scalar_lea.vmem [#allocation2], %s239
        // Predicated region
        $region33: #{patch_embed_forward.1} parent=31 // pred_check
          %p241 = pneg %p103
        $region34: #{patch_embed_forward.1} parent=31 // pred_check_branch
          %243 = sbr.rel (%p241) target = $region36
        $region35: #{patch_embed_forward.1} parent=31 // pred_region
          %s244 = smul.u32 2, %s17
          %246 = vsyncadd %s237, 0
          %s247 = smul.addr %s244, 8
          %s248 = scalar_lea.hbm %s3, %s247
          %s249 = sshll.u32 %s240, 4
          %s250 = int_to_ptr.vmem [resolvable:$true] %s249
          %s251 = sshll.u32 %s248, 4
          %s252 = int_to_ptr.hbm [resolvable:$true] %s251
          %257 = dma.vmem_to_hbm [thread:$0]  %s250, 256, %s252, %s237, 128, 128, 8
        $region36: #{patch_embed_forward.1} parent=31 // pred_fallthru
          _
      $region32: #{patch_embed_forward.1} parent=5 // pred_fallthru
        _
      %p258 = scmp.le.s32.totalorder 2, %s12
      // Predicated region
      $region37: #{patch_embed_forward.1} parent=5 // pred_check
        %p259 = pneg %p258
      $region38: #{patch_embed_forward.1} parent=5 // pred_check_branch
        %261 = sbr.rel (%p259) target = $region40
      $region39: #{patch_embed_forward.1} parent=5 // pred_region
        %s262 = ssub.s32 %s12, 2
        // Predicated region
        $region41: #{patch_embed_forward.1} parent=39 // pred_check
          %p263 = pneg %p109
        $region42: #{patch_embed_forward.1} parent=39 // pred_check_branch
          %265 = sbr.rel (%p263) target = $region44
        $region43: #{patch_embed_forward.1} parent=39 // pred_region
          %s266 = sand.u32 %s94, 1
          %s267 = scalar_lea.sflag [#allocation3], %s266
          %s268 = sand.u32 %s94, 1
          %s269 = smul.addr %s268, 16
          %s270 = scalar_lea.vmem [#allocation2], %s269
          %272 = dma.done %s267, 256
        $region44: #{patch_embed_forward.1} parent=39 // pred_fallthru
          _
      $region40: #{patch_embed_forward.1} parent=5 // pred_fallthru
        _
    $region6: #{patch_embed_forward.1} parent=1 // loop_footer
      %s16 = sadd.s32 1, %s12
    $region7: #{patch_embed_forward.1} parent=1 // loop_footer_branch
      %11 = sbr.rel target = $region3
    $region8: #{patch_embed_forward.1} parent=1 // loop_exit
      _
    %273 = vsyncpa [#allocation3], 1
    %s274 = scalar_lea.sflag [#allocation3], 1
    %275 = vsyncpa %s274, 1

</llo_original>
